<compile_context>
chip_gen: v5e
topology: v5e:2x2
jax: 0.10.0
libtpu: 0.0.40
codegen_flags: <defaults>
</compile_context>

<pallas_src>
import math
import functools

import jax
import jax.numpy as jnp
from jax.experimental import pallas as pl
from jax.experimental.pallas import tpu as pltpu

_LANE = 128
_SUBLANE = 8


# --------------------------- kernels ---------------------------------------

def _pe_add_kernel(pe_ref, x_ref, o_ref):
    # x block: (Bt, Nt); pe block: (1, Nt) -> sublane-broadcast add over batch rows.
    o_ref[...] = (x_ref[...].astype(jnp.float32) + pe_ref[...]).astype(o_ref.dtype)


def _pe_add_dropout_kernel(pe_ref, x_ref, bits_ref, o_ref, *, threshold, scale):
    y = x_ref[...].astype(jnp.float32) + pe_ref[...]
    keep = bits_ref[...] >= jnp.uint32(threshold)          # P(keep) = 1 - drop_p
    o_ref[...] = jnp.where(keep, y * jnp.float32(scale),
                           jnp.float32(0.0)).astype(o_ref.dtype)


# --------------------------- host-side helpers ------------------------------

def make_sinusoidal_pe(max_len: int, d_model: int) -> jax.Array:
    """The constant PE buffer of the PyTorch module, shape (max_len, d_model)."""
    pos = jnp.arange(max_len, dtype=jnp.float32)[:, None]
    two_i = jnp.arange(0, d_model, 2, dtype=jnp.float32)
    div_term = jnp.exp(-(two_i / d_model) * math.log(10000.0))
    pe = jnp.zeros((max_len, d_model), jnp.float32)
    pe = pe.at[:, 0::2].set(jnp.sin(pos * div_term))
    pe = pe.at[:, 1::2].set(jnp.cos(pos * div_term))
    return pe


def _choose_tiles(batch: int, n_pad: int):
    # Lane tile: multiple of 128.  Row tile: full batch if small, else a
    # multiple of 8.  Largest block = 64*16384*4 B = 4 MiB; with double-
    # buffered x/bits/out blocks (+ resident PE) that is ~25 MiB, safely
    # inside v7x's 64 MiB VMEM and the default scoped limits of v5e/v6e.
    nt = min(n_pad, 16384)
    bt = batch if batch <= _SUBLANE else min((batch // _SUBLANE) * _SUBLANE, 64)
    return bt, nt


def positional_encoding(x: jax.Array, pe: jax.Array, drop_p: float,
                        key=None) -> jax.Array:
    """dropout(x + pe[None]) with x: (B, L, D) and pe: (L, D)."""
    if not 0.0 <= drop_p < 1.0:
        raise ValueError("drop_p must be in [0, 1)")
    B, L, D = x.shape
    assert pe.shape == (L, D)

    n = L * D
    n_pad = ((n + _LANE - 1) // _LANE) * _LANE
    x2 = x.reshape(B, n)
    pe2 = pe.reshape(1, n)
    if n_pad != n:                       # keep the output lane-dense
        x2 = jnp.pad(x2, ((0, 0), (0, n_pad - n)))
        pe2 = jnp.pad(pe2, ((0, 0), (0, n_pad - n)))

    bt, nt = _choose_tiles(B, n_pad)
    # n outer, batch inner: the PE block index never changes inside the batch
    # sweep, so Pallas keeps it resident (no re-DMA per batch step).
    grid = (pl.cdiv(n_pad, nt), pl.cdiv(B, bt))

    pe_spec = pl.BlockSpec((1, nt), lambda ni, bi: (0, ni))
    x_spec = pl.BlockSpec((bt, nt), lambda ni, bi: (bi, ni))
    out_spec = pl.BlockSpec((bt, nt), lambda ni, bi: (bi, ni))

    compiler_params = pltpu.CompilerParams(
        dimension_semantics=("parallel", "parallel"),
        vmem_limit_bytes=48 * 1024 * 1024,        # headroom on v7x's 64 MiB VMEM
    )
    out_shape = jax.ShapeDtypeStruct((B, n_pad), x.dtype)
    elem_bytes = jnp.dtype(x.dtype).itemsize

    if drop_p > 0.0:
        if key is None:
            raise ValueError("a PRNG key is required when drop_p > 0")
        bits = jax.random.bits(key, (B, n_pad), dtype=jnp.uint32)
        threshold = min(int(round(drop_p * (1 << 32))), (1 << 32) - 1)
        scale = 1.0 / (1.0 - drop_p)
        kernel = functools.partial(_pe_add_dropout_kernel,
                                   threshold=threshold, scale=scale)
        cost = pl.CostEstimate(
            flops=3 * B * n_pad, transcendentals=0,
            bytes_accessed=B * n_pad * (2 * elem_bytes + 4) + n_pad * 4)
        out2 = pl.pallas_call(
            kernel,
            out_shape=out_shape,
            grid=grid,
            in_specs=[pe_spec, x_spec, x_spec],   # bits uses the same tiling as x
            out_specs=out_spec,
            compiler_params=compiler_params,
            cost_estimate=cost,
        )(pe2, x2, bits)
    else:
        cost = pl.CostEstimate(
            flops=B * n_pad, transcendentals=0,
            bytes_accessed=2 * B * n_pad * elem_bytes + n_pad * 4)
        out2 = pl.pallas_call(
            _pe_add_kernel,
            out_shape=out_shape,
            grid=grid,
            in_specs=[pe_spec, x_spec],
            out_specs=out_spec,
            compiler_params=compiler_params,
            cost_estimate=cost,
        )(pe2, x2)

    if n_pad != n:
        out2 = out2[:, :n]
    return out2.reshape(B, L, D)


# --------------------------- demo / self-test --------------------------------

if __name__ == "__main__":
    # Small shapes consistent with the module: d_model=32, max_len=8, batch=2.
    B, max_len, d_model = 2, 8, 32
    dropout = 0.1

    key = jax.random.PRNGKey(0)
    kx, kd = jax.random.split(key)
    x = jax.random.normal(kx, (B, max_len, d_model), dtype=jnp.float32)
    pe = make_sinusoidal_pe(max_len, d_model)

    # 1) Dropout disabled: must match the pure-JAX reference x + PE exactly.
    out_nodrop = positional_encoding(x, pe, 0.0)
    jax.block_until_ready(out_nodrop)
    ref = x + pe[None]
    assert jnp.allclose(out_nodrop, ref, atol=1e-5, rtol=1e-5), "PE add mismatch"

    # 2) Dropout enabled (training-mode semantics): every element is either 0
    #    or (x + PE) / (1 - p).
    out = positional_encoding(x, pe, dropout, key=kd)
    jax.block_until_ready(out)
    assert out.shape == (B, max_len, d_model)
    kept = (x + pe[None]) / (1.0 - dropout)
    ok = jnp.isclose(out, kept, atol=1e-5, rtol=1e-5) | (out == 0.0)
    assert bool(jnp.all(ok)), "dropout output not in {0, (x+PE)/(1-p)}"

    print("KERNEL_OK")
</pallas_src>

<mosaic_0001>
module attributes {stable_mosaic.version = 11 : i64} {
  func.func @_pe_add_kernel(%arg0: i32, %arg1: i32, %arg2: memref<1x256xf32, #tpu.memory_space<vmem>>, %arg3: memref<2x256xf32, #tpu.memory_space<vmem>>, %arg4: memref<2x256xf32, #tpu.memory_space<vmem>>) attributes {dimension_semantics = [#tpu.dimension_semantics<parallel>, #tpu.dimension_semantics<parallel>], iteration_bounds = array<i64: 1, 1>, scalar_prefetch = 0 : i64, scratch_operands = 0 : i64, tpu.core_type = #tpu.core_type<tc>, window_params = [{transform_indices = @transform_0, window_bounds = array<i64: 1, 256>}, {transform_indices = @transform_1, window_bounds = array<i64: 2, 256>}, {transform_indices = @transform_2, window_bounds = array<i64: 2, 256>}]} {
    %c0 = arith.constant 0 : index
    %c0_0 = arith.constant 0 : index
    %0 = vector.load %arg3[%c0, %c0_0] : memref<2x256xf32, #tpu.memory_space<vmem>>, vector<2x256xf32>
    %c0_1 = arith.constant 0 : index
    %c0_2 = arith.constant 0 : index
    %1 = vector.load %arg2[%c0_1, %c0_2] : memref<1x256xf32, #tpu.memory_space<vmem>>, vector<1x256xf32>
    %2 = vector.broadcast %1 : vector<1x256xf32> to vector<2x256xf32>
    %3 = arith.addf %0, %2 : vector<2x256xf32>
    %c0_3 = arith.constant 0 : index
    %c0_4 = arith.constant 0 : index
    %4 = vector.load %arg4[%c0_3, %c0_4] : memref<2x256xf32, #tpu.memory_space<vmem>>, vector<2x256xf32>
    tpu.vector_store %arg4[%c0_3, %c0_4], %3 {strides = array<i32>} : memref<2x256xf32, #tpu.memory_space<vmem>>, vector<2x256xf32>,
    return
  }
  func.func @transform_0(%arg0: i32, %arg1: i32) -> (i32, i32) {
    %c0_i32 = arith.constant 0 : i32
    %c0_i32_0 = arith.constant 0 : i32
    return %c0_i32, %arg0 : i32, i32
  }
  func.func @transform_1(%arg0: i32, %arg1: i32) -> (i32, i32) {
    %c0_i32 = arith.constant 0 : i32
    return %arg1, %arg0 : i32, i32
  }
  func.func @transform_2(%arg0: i32, %arg1: i32) -> (i32, i32) {
    %c0_i32 = arith.constant 0 : i32
    return %arg1, %arg0 : i32, i32
  }
}

</mosaic_0001>

<llo_original>
// kernel: tpu_custom_call.1
$region0: #{tpu_custom_call.1}
  #allocation0 [shape = 'u32[]', space=smem, size = 0x4, offset = 0x4, fixed_abs, tag = 'smem constant byte address 0x4 - core index']
  #allocation1 [shape = 'u32[72,128]{1,0:T(1,128)}', space=vmem, size = 0x9000, scoped, tag = 'internal scratch']
  %s0 = inlined_call_operand.hbm [shape: f32[1,256], index: 0, kind: input, shape index: {}]
  %s1 = inlined_call_operand.hbm [shape: f32[2,256], index: 1, kind: input, shape index: {}]
  %s2 = inlined_call_operand.hbm [shape: f32[2,256], index: 2, kind: output, shape index: {}]
  %s3 = sld [smem:[#allocation0]]
  $region26: #{tpu_custom_call.1} parent=0
    _
  %s5 = ssub.s32 1, %s3
  %s6 = scalar_select 0, %s5, %s3
  $region1: #{tpu_custom_call.1} parent=0
    #allocation2 [shape = 'u8[1024]{0}', space=vmem, size = 0x400, scoped, tag = 'input window, operand 0, single buffered']
    #allocation3 [shape = 's32[1]{0}', space=sflag, size = 0x4, scoped, tag = 'scoped memory for tpu_custom_call.1']
    #allocation4 [shape = 's32[1]{0}', space=sflag, size = 0x4, scoped, tag = 'scoped memory for tpu_custom_call.1']
    #allocation5 [shape = 'u8[2048]{0}', space=vmem, size = 0x800, scoped, tag = 'input window, operand 1, single buffered']
    #allocation6 [shape = 's32[1]{0}', space=sflag, size = 0x4, scoped, tag = 'scoped memory for tpu_custom_call.1']
    #allocation7 [shape = 'u8[2048]{0}', space=vmem, size = 0x800, scoped, tag = 'output window, operand 0, single buffered']
    %7 = vsyncpa [#allocation3], 0
    %8 = vsyncpa [#allocation6], 0
    %9 = vsyncpa [#allocation4], 0
    // Predicated region
    $region2: #{tpu_custom_call.1} parent=1 // pred_check
      _
    $region3: #{tpu_custom_call.1} parent=1 // pred_check_branch
      %11 = sbr.rel (0) target = $region5
    $region4: #{tpu_custom_call.1} parent=1 // pred_region
      %13 = vsyncadd [#allocation3], 0
      %s15 = sshll.u32 %s0, 4
      %s16 = int_to_ptr.hbm [resolvable:$true] %s15
      %s17 = sshll.u32 [#allocation2], 4
      %s18 = int_to_ptr.vmem [resolvable:$true] %s17
      %20 = dma.hbm_to_vmem [thread:$0]  %s16, 32, %s18, [#allocation3]
    $region5: #{tpu_custom_call.1} parent=1 // pred_fallthru
      _
    // Predicated region
    $region6: #{tpu_custom_call.1} parent=1 // pred_check
      _
    $region7: #{tpu_custom_call.1} parent=1 // pred_check_branch
      %22 = sbr.rel (0) target = $region9
    $region8: #{tpu_custom_call.1} parent=1 // pred_region
      %24 = vsyncadd [#allocation6], 0
      %s26 = sshll.u32 %s1, 4
      %s27 = int_to_ptr.hbm [resolvable:$true] %s26
      %s28 = sshll.u32 [#allocation5], 4
      %s29 = int_to_ptr.vmem [resolvable:$true] %s28
      %31 = dma.hbm_to_vmem [thread:$0]  %s27, 64, %s29, [#allocation6]
    $region9: #{tpu_custom_call.1} parent=1 // pred_fallthru
      _
    // Predicated region
    $region10: #{tpu_custom_call.1} parent=1 // pred_check
      _
    $region11: #{tpu_custom_call.1} parent=1 // pred_check_branch
      %33 = sbr.rel (0) target = $region13
    $region12: #{tpu_custom_call.1} parent=1 // pred_region
      %35 = dma.done [#allocation3], 32
    $region13: #{tpu_custom_call.1} parent=1 // pred_fallthru
      _
    // Predicated region
    $region14: #{tpu_custom_call.1} parent=1 // pred_check
      _
    $region15: #{tpu_custom_call.1} parent=1 // pred_check_branch
      %37 = sbr.rel (0) target = $region17
    $region16: #{tpu_custom_call.1} parent=1 // pred_region
      %39 = dma.done [#allocation6], 64
    $region17: #{tpu_custom_call.1} parent=1 // pred_fallthru
      _
    %v40 = vld [vmem:[#allocation5] sm:$0xf]
    %v41 = vld [vmem:[#allocation2] sm:$0x3]
    %v43 = vperm.slane %v41, 0
    %v44 = vperm.slane %v41, 1
    %v45 = vrot.slane %v44, 6
    %vm46 = vcmask 1041408
    %v47 = vsel %vm46, %v43, %v45
    %v49 = vadd.f32 %v40, %v47
    %50 = vst [vmem:[#allocation7] sm:$0xf] %v49
    // Predicated region
    $region18: #{tpu_custom_call.1} parent=1 // pred_check
      _
    $region19: #{tpu_custom_call.1} parent=1 // pred_check_branch
      %52 = sbr.rel (0) target = $region21
    $region20: #{tpu_custom_call.1} parent=1 // pred_region
      %54 = vsyncadd [#allocation4], 0
      %s56 = sshll.u32 [#allocation7], 4
      %s57 = int_to_ptr.vmem [resolvable:$true] %s56
      %s58 = sshll.u32 %s2, 4
      %s59 = int_to_ptr.hbm [resolvable:$true] %s58
      %61 = dma.vmem_to_hbm [thread:$0]  %s57, 64, %s59, [#allocation4]
    $region21: #{tpu_custom_call.1} parent=1 // pred_fallthru
      _
    // Predicated region
    $region22: #{tpu_custom_call.1} parent=1 // pred_check
      _
    $region23: #{tpu_custom_call.1} parent=1 // pred_check_branch
      %63 = sbr.rel (0) target = $region25
    $region24: #{tpu_custom_call.1} parent=1 // pred_region
      %65 = dma.done [#allocation4], 64
    $region25: #{tpu_custom_call.1} parent=1 // pred_fallthru
      _
    %66 = vsyncpa [#allocation3], 1
    %67 = vsyncpa [#allocation6], 1
    %68 = vsyncpa [#allocation4], 1

</llo_original>
